<compile_context>
chip_gen: v6e
topology: v6e:2x2x1
jax: 0.10.0
libtpu: 0.0.40
codegen_flags: <defaults>
</compile_context>

<pallas_src>
import functools

import jax
import jax.numpy as jnp
from jax import lax
from jax.experimental import pallas as pl
from jax.experimental.pallas import tpu as pltpu


def _round_up(x, m):
    return ((x + m - 1) // m) * m


def _ln_math(x, gamma, beta, eps):
    # LayerNorm over the last axis, f32 statistics (torch defaults, eps broadcastable affine).
    mu = jnp.mean(x, axis=-1, keepdims=True)
    var = jnp.mean(jnp.square(x - mu), axis=-1, keepdims=True)
    return (x - mu) * lax.rsqrt(var + eps) * gamma + beta


# --------------------- 1x1-conv projection (tiled, bf16 MXU, fused ReLU) ---------------------

def _proj_kernel(x_ref, w_ref, b_ref, o_ref):
    acc = jnp.dot(x_ref[...], w_ref[...], preferred_element_type=jnp.float32)
    o_ref[...] = jnp.maximum(acc + b_ref[...], 0.0)


def project_relu(x, w, b, *, tile_m=512):
    """relu(x @ w + b): x (M, K) -> (M, N). Tiled over M so DMA of tile i+1 overlaps MXU on i.

    TILE_M=512 keeps the double-buffered bf16 activation tile (~2 MiB/buf at K=2048) well
    under v7x's 32 MiB default scoped VMEM while saturating v5e/v6e; the M axis is marked
    'parallel' so v7x's two TensorCores split it.
    """
    M, K = x.shape
    N = w.shape[1]
    tile_m = min(tile_m, _round_up(M, 8))
    m_pad = _round_up(M, tile_m)
    xb = x.astype(jnp.bfloat16)                 # halves HBM/VMEM bytes on the K=2048 matmul
    if m_pad != M:
        xb = jnp.pad(xb, ((0, m_pad - M), (0, 0)))
    wb = w.astype(jnp.bfloat16)
    out = pl.pallas_call(
        _proj_kernel,
        out_shape=jax.ShapeDtypeStruct((m_pad, N), jnp.float32),
        grid=(m_pad // tile_m,),
        in_specs=[pl.BlockSpec((tile_m, K), lambda i: (i, 0)),
                  pl.BlockSpec((K, N), lambda i: (0, 0)),
                  pl.BlockSpec((1, N), lambda i: (0, 0))],
        out_specs=pl.BlockSpec((tile_m, N), lambda i: (i, 0)),
        compiler_params=pltpu.CompilerParams(dimension_semantics=("parallel",)),
    )(xb, wb, b)
    return out[:M] if m_pad != M else out


# --------------------- fused multi-head attention block ---------------------
# One pallas_call per attention: QKV projections, all heads, softmax, output projection,
# residual add and LayerNorm (pre- or post-norm), plus head-averaged attention weights.

def _mha_block_kernel(tgt_ref, kv_ref, pos_ref, wq_ref, bq_ref, wk_ref, bk_ref,
                      wv_ref, bv_ref, wo_ref, bo_ref, g_ref, beta_ref,
                      out_ref, attn_ref, *, num_heads, scale, norm_first, is_self, eps):
    _, lq, d = tgt_ref.shape
    lk = kv_ref.shape[1]
    dh = d // num_heads

    tgt = tgt_ref[0]            # (Lq, D) residual / query source
    pos = pos_ref[0]            # (Lq, D) query positional embedding (zeros if unused)
    gamma = g_ref[...]
    beta = beta_ref[...]

    x = _ln_math(tgt, gamma, beta, eps) if norm_first else tgt
    q_src = x + pos
    if is_self:
        k_src = q_src           # key = with_pos(x)
        v_src = x               # value = x
    else:
        k_src = kv_ref[0]       # key = value = memory
        v_src = k_src

    q = jnp.dot(q_src, wq_ref[...], preferred_element_type=jnp.float32) + bq_ref[...]
    k = jnp.dot(k_src, wk_ref[...], preferred_element_type=jnp.float32) + bk_ref[...]
    v = jnp.dot(v_src, wv_ref[...], preferred_element_type=jnp.float32) + bv_ref[...]
    wo = wo_ref[...]

    attn_sum = jnp.zeros((lq, lk), jnp.float32)
    attn_out = jnp.zeros((lq, d), jnp.float32)
    for h in range(num_heads):                  # static unroll (num_heads is small & static)
        sl = slice(h * dh, (h + 1) * dh)
        qh, kh, vh = q[:, sl], k[:, sl], v[:, sl]
        s = lax.dot_general(qh, kh, (((1,), (1,)), ((), ())),
                            preferred_element_type=jnp.float32) * scale
        m = jnp.max(s, axis=-1, keepdims=True)
        e = jnp.exp(s - m)
        p = e / jnp.sum(e, axis=-1, keepdims=True)
        attn_sum = attn_sum + p
        oh = jnp.dot(p, vh, preferred_element_type=jnp.float32)
        # concat(heads) @ wo  ==  sum_h oh @ wo[h*dh:(h+1)*dh, :]  (avoids in-kernel concat)
        attn_out = attn_out + jnp.dot(oh, wo[sl, :], preferred_element_type=jnp.float32)
    attn_out = attn_out + bo_ref[...]

    if norm_first:
        out = tgt + attn_out
    else:
        out = _ln_math(tgt + attn_out, gamma, beta, eps)
    out_ref[0] = out
    attn_ref[0] = attn_sum * (1.0 / num_heads)   # nn.MultiheadAttention averages over heads


def mha_block(tgt, kv, pos, p, gamma, beta, *, num_heads, norm_first, is_self, eps=1e-5):
    B, Lq, D = tgt.shape
    Lk = kv.shape[1]
    if pos is None:
        pos = jnp.zeros((B, Lq, D), jnp.float32)
    scale = 1.0 / float(D // num_heads) ** 0.5
    kernel = functools.partial(_mha_block_kernel, num_heads=num_heads, scale=scale,
                               norm_first=norm_first, is_self=is_self, eps=eps)
    vec = lambda b: (b, 0, 0)
    mat = lambda b: (0, 0)
    out, attn = pl.pallas_call(
        kernel,
        out_shape=(jax.ShapeDtypeStruct((B, Lq, D), jnp.float32),
                   jax.ShapeDtypeStruct((B, Lq, Lk), jnp.float32)),
        grid=(B,),
        in_specs=[pl.BlockSpec((1, Lq, D), vec),
                  pl.BlockSpec((1, Lk, D), vec),
                  pl.BlockSpec((1, Lq, D), vec),
                  pl.BlockSpec((D, D), mat), pl.BlockSpec((1, D), mat),
                  pl.BlockSpec((D, D), mat), pl.BlockSpec((1, D), mat),
                  pl.BlockSpec((D, D), mat), pl.BlockSpec((1, D), mat),
                  pl.BlockSpec((D, D), mat), pl.BlockSpec((1, D), mat),
                  pl.BlockSpec((1, D), mat), pl.BlockSpec((1, D), mat)],
        out_specs=(pl.BlockSpec((1, Lq, D), vec),
                   pl.BlockSpec((1, Lq, Lk), vec)),
        compiler_params=pltpu.CompilerParams(dimension_semantics=("parallel",)),
    )(tgt, kv, pos, p["wq"], p["bq"], p["wk"], p["bk"],
      p["wv"], p["bv"], p["wo"], p["bo"], gamma, beta)
    return out, attn


# --------------------- fused FFN block (+ optional fused per-class readout) ---------------------

def _ffn_block_kernel(tgt_ref, w1_ref, b1_ref, w2_ref, b2_ref, g_ref, beta_ref,
                      *rest, norm_first, eps, with_fc):
    if with_fc:
        wfc_ref, bfc_ref, out_ref, y_ref = rest
    else:
        (out_ref,) = rest
    b, l, d = tgt_ref.shape
    tgt = tgt_ref[...].reshape(b * l, d)
    gamma = g_ref[...]
    beta = beta_ref[...]
    x = _ln_math(tgt, gamma, beta, eps) if norm_first else tgt
    h = jnp.maximum(jnp.dot(x, w1_ref[...], preferred_element_type=jnp.float32) + b1_ref[...],
                    0.0)                                      # activation='relu'
    h = jnp.dot(h, w2_ref[...], preferred_element_type=jnp.float32) + b2_ref[...]
    out2 = (tgt + h) if norm_first else _ln_math(tgt + h, gamma, beta, eps)
    hidden = out2.reshape(b, l, d)
    out_ref[...] = hidden
    if with_fc:
        # Head.forward_fc fused into the last decoder layer: (w * h).sum(-1) + b
        y_ref[...] = jnp.sum(hidden * wfc_ref[...], axis=-1) + bfc_ref[...]


def ffn_block(tgt, w1, b1, w2, b2, gamma, beta, *, norm_first, fc_w=None, fc_b=None, eps=1e-5):
    B, L, D = tgt.shape
    Fd = w1.shape[1]
    with_fc = fc_w is not None
    kernel = functools.partial(_ffn_block_kernel, norm_first=norm_first, eps=eps, with_fc=with_fc)
    full3 = lambda i: (0, 0, 0)
    full2 = lambda i: (0, 0)
    in_specs = [pl.BlockSpec((B, L, D), full3),
                pl.BlockSpec((D, Fd), full2), pl.BlockSpec((1, Fd), full2),
                pl.BlockSpec((Fd, D), full2), pl.BlockSpec((1, D), full2),
                pl.BlockSpec((1, D), full2), pl.BlockSpec((1, D), full2)]
    args = [tgt, w1, b1, w2, b2, gamma, beta]
    if with_fc:
        C = fc_w.shape[1]
        in_specs += [pl.BlockSpec((1, C, D), full3), pl.BlockSpec((1, C), full2)]
        args += [fc_w, fc_b]
        out_shape = (jax.ShapeDtypeStruct((B, L, D), jnp.float32),
                     jax.ShapeDtypeStruct((B, C), jnp.float32))
        out_specs = (pl.BlockSpec((B, L, D), full3), pl.BlockSpec((B, C), full2))
    else:
        out_shape = jax.ShapeDtypeStruct((B, L, D), jnp.float32)
        out_specs = pl.BlockSpec((B, L, D), full3)
    return pl.pallas_call(
        kernel, out_shape=out_shape, grid=(1,),
        in_specs=in_specs, out_specs=out_specs,
    )(*args)


# --------------------- decoder / head glue (plain JAX orchestration) ---------------------

def decoder_layer(tgt, memory, query_pos, p, cfg, *, fc_w=None, fc_b=None):
    nh = cfg["num_heads"]
    nf = cfg["norm_first"]
    if not cfg["remove_self_attn"]:
        tgt, _ = mha_block(tgt, tgt, query_pos, p["self_attn"], p["norm1_g"], p["norm1_b"],
                           num_heads=nh, norm_first=nf, is_self=True)
    tgt, attn = mha_block(tgt, memory, query_pos, p["cross_attn"], p["norm2_g"], p["norm2_b"],
                          num_heads=nh, norm_first=nf, is_self=False)
    out = ffn_block(tgt, p["ffn_w1"], p["ffn_b1"], p["ffn_w2"], p["ffn_b2"],
                    p["norm3_g"], p["norm3_b"], norm_first=nf, fc_w=fc_w, fc_b=fc_b)
    # Dropout(0.1) is identity in eval mode.
    if fc_w is not None:
        tgt, y = out
        return tgt, attn, y
    return out, attn, None


def head_forward(params, features, cfg):
    """features: (B, 2048, H, W) NCHW -> (y_hats (B, num_classes), attn (B, num_classes, H*W))."""
    B, Cin, H, W = features.shape
    D = cfg["hidden_size"]
    C = cfg["num_classes"]

    # 1x1 conv == per-pixel linear projection over channels, fused with ReLU.
    x = jnp.transpose(features, (0, 2, 3, 1)).reshape(B * H * W, Cin)
    memory = project_relu(x, params["proj_w"], params["proj_b"]).reshape(B, H * W, D)

    tgt = jnp.broadcast_to(params["query_emb"][None], (B, C, D))
    query_pos = tgt if cfg["keep_query_position"] else None

    n_layers = len(params["layers"])
    attn = None
    y_hats = None
    for li, layer_p in enumerate(params["layers"]):
        last = li == n_layers - 1
        tgt, attn, y = decoder_layer(tgt, memory, query_pos, layer_p, cfg,
                                     fc_w=params["w"] if last else None,
                                     fc_b=params["b"] if last else None)
        if last:
            y_hats = y
    return y_hats, attn


# --------------------- deterministic init ---------------------

def init_params(key, cfg):
    D = cfg["hidden_size"]
    C = cfg["num_classes"]
    Fd = cfg["feedforward_size"]
    Cin = cfg["channel_size"]
    keys = iter(jax.random.split(key, 128))

    def nrm(shape, scale):
        return jax.random.normal(next(keys), shape, jnp.float32) * scale

    def attn_params():
        s = (1.0 / D) ** 0.5
        return {"wq": nrm((D, D), s), "bq": jnp.zeros((1, D), jnp.float32),
                "wk": nrm((D, D), s), "bk": jnp.zeros((1, D), jnp.float32),
                "wv": nrm((D, D), s), "bv": jnp.zeros((1, D), jnp.float32),
                "wo": nrm((D, D), s), "bo": jnp.zeros((1, D), jnp.float32)}

    params = {
        "query_emb": nrm((C, D), 1.0),                        # nn.Embedding ~ N(0,1)
        "proj_w": nrm((Cin, D), (1.0 / Cin) ** 0.5),          # Conv2d(2048, D, 1) weight (K x N)
        "proj_b": jnp.zeros((1, D), jnp.float32),
        "w": nrm((1, C, D), (2.0 / (C + D)) ** 0.5),          # xavier_normal_
        "b": jnp.zeros((1, C), jnp.float32),                  # constant_(0)
        "layers": [],
    }
    for _ in range(cfg["num_decoder_layers"]):
        params["layers"].append({
            "self_attn": attn_params(),
            "cross_attn": attn_params(),
            "norm1_g": jnp.ones((1, D), jnp.float32), "norm1_b": jnp.zeros((1, D), jnp.float32),
            "norm2_g": jnp.ones((1, D), jnp.float32), "norm2_b": jnp.zeros((1, D), jnp.float32),
            "norm3_g": jnp.ones((1, D), jnp.float32), "norm3_b": jnp.zeros((1, D), jnp.float32),
            "ffn_w1": nrm((D, Fd), (1.0 / D) ** 0.5), "ffn_b1": jnp.zeros((1, Fd), jnp.float32),
            "ffn_w2": nrm((Fd, D), (1.0 / Fd) ** 0.5), "ffn_b2": jnp.zeros((1, D), jnp.float32),
        })
    return params


# --------------------- main ---------------------

if __name__ == "__main__":
    cfg = dict(
        num_classes=8,
        hidden_size=32,
        num_heads=4,
        num_decoder_layers=1,
        feedforward_size=64,
        channel_size=2048,          # hardcoded in the PyTorch module
        norm_first=False,
        remove_self_attn=False,
        keep_query_position=False,
    )
    key = jax.random.PRNGKey(0)
    pkey, xkey = jax.random.split(key)
    params = init_params(pkey, cfg)

    B, H, W = 2, 4, 4
    features = jax.random.normal(xkey, (B, cfg["channel_size"], H, W), jnp.float32)

    y_hats, attn_weights = head_forward(params, features, cfg)
    jax.block_until_ready((y_hats, attn_weights))

    assert y_hats.shape == (B, cfg["num_classes"])
    assert attn_weights.shape == (B, cfg["num_classes"], H * W)
    assert jnp.all(jnp.isfinite(y_hats)) and jnp.all(jnp.isfinite(attn_weights))
    print("KERNEL_OK")
</pallas_src>

<mosaic_0001>
module attributes {stable_mosaic.version = 11 : i64} {
  func.func @_proj_kernel(%arg0: i32, %arg1: memref<32x2048xbf16, #tpu.memory_space<vmem>>, %arg2: memref<2048x32xbf16, #tpu.memory_space<vmem>>, %arg3: memref<1x32xf32, #tpu.memory_space<vmem>>, %arg4: memref<32x32xf32, #tpu.memory_space<vmem>>) attributes {dimension_semantics = [#tpu.dimension_semantics<parallel>], iteration_bounds = array<i64: 1>, scalar_prefetch = 0 : i64, scratch_operands = 0 : i64, tpu.core_type = #tpu.core_type<tc>, window_params = [{transform_indices = @transform_0, window_bounds = array<i64: 32, 2048>}, {pipeline_mode = #tpu.pipeline_mode<synchronous>, transform_indices = @transform_1, window_bounds = array<i64: 2048, 32>}, {pipeline_mode = #tpu.pipeline_mode<synchronous>, transform_indices = @transform_2, window_bounds = array<i64: 1, 32>}, {transform_indices = @transform_3, window_bounds = array<i64: 32, 32>}]} {
    %c0 = arith.constant 0 : index
    %c0_0 = arith.constant 0 : index
    %0 = vector.load %arg1[%c0, %c0_0] : memref<32x2048xbf16, #tpu.memory_space<vmem>>, vector<32x2048xbf16>
    %c0_1 = arith.constant 0 : index
    %c0_2 = arith.constant 0 : index
    %1 = vector.load %arg2[%c0_1, %c0_2] : memref<2048x32xbf16, #tpu.memory_space<vmem>>, vector<2048x32xbf16>
    %cst = arith.constant dense<0.000000e+00> : vector<32x32xf32>
    %2 = tpu.matmul %0, %1, %cst {dimension_numbers = #tpu.dot_dimension_numbers<[1], [0], [0], [1], [0, 0, 1, 1], [], []>} : vector<32x2048xbf16>, vector<2048x32xbf16>, vector<32x32xf32> -> vector<32x32xf32>
    %c0_3 = arith.constant 0 : index
    %c0_4 = arith.constant 0 : index
    %3 = vector.load %arg3[%c0_3, %c0_4] : memref<1x32xf32, #tpu.memory_space<vmem>>, vector<1x32xf32>
    %4 = vector.broadcast %3 : vector<1x32xf32> to vector<32x32xf32>
    %5 = arith.addf %2, %4 : vector<32x32xf32>
    %cst_5 = arith.constant 0.000000e+00 : f32
    %6 = vector.broadcast %cst_5 : f32 to vector<32x32xf32>
    %7 = arith.maximumf %5, %6 : vector<32x32xf32>
    %c0_6 = arith.constant 0 : index
    %c0_7 = arith.constant 0 : index
    %8 = vector.load %arg4[%c0_6, %c0_7] : memref<32x32xf32, #tpu.memory_space<vmem>>, vector<32x32xf32>
    tpu.vector_store %arg4[%c0_6, %c0_7], %7 {strides = array<i32>} : memref<32x32xf32, #tpu.memory_space<vmem>>, vector<32x32xf32>,
    return
  }
  func.func @transform_0(%arg0: i32) -> (i32, i32) {
    %c0_i32 = arith.constant 0 : i32
    %c0_i32_0 = arith.constant 0 : i32
    return %arg0, %c0_i32 : i32, i32
  }
  func.func @transform_1(%arg0: i32) -> (i32, i32) {
    %c0_i32 = arith.constant 0 : i32
    %c0_i32_0 = arith.constant 0 : i32
    %c0_i32_1 = arith.constant 0 : i32
    return %c0_i32, %c0_i32_0 : i32, i32
  }
  func.func @transform_2(%arg0: i32) -> (i32, i32) {
    %c0_i32 = arith.constant 0 : i32
    %c0_i32_0 = arith.constant 0 : i32
    %c0_i32_1 = arith.constant 0 : i32
    return %c0_i32, %c0_i32_0 : i32, i32
  }
  func.func @transform_3(%arg0: i32) -> (i32, i32) {
    %c0_i32 = arith.constant 0 : i32
    %c0_i32_0 = arith.constant 0 : i32
    return %arg0, %c0_i32 : i32, i32
  }
}

</mosaic_0001>

<llo_original>
// kernel: tpu_custom_call.1
$region0: #{tpu_custom_call.1}
  #allocation0 [shape = 'u32[]', space=smem, size = 0x4, offset = 0x4, fixed_abs, tag = 'smem constant byte address 0x4 - core index']
  #allocation1 [shape = 'u32[144,128]{1,0:T(1,128)}', space=vmem, size = 0x12000, scoped, tag = 'internal scratch']
  %s0 = inlined_call_operand.vmem [shape: bf16[32,2048], index: 0, kind: input, shape index: {}]
  %s1 = inlined_call_operand.vmem [shape: bf16[2048,32], index: 1, kind: input, shape index: {}]
  %s2 = inlined_call_operand.vmem [shape: f32[1,32], index: 2, kind: input, shape index: {}]
  %s3 = inlined_call_operand.hbm [shape: f32[32,32], index: 3, kind: output, shape index: {}]
  %s4 = sld [smem:[#allocation0]]
  $region22: #{tpu_custom_call.1} parent=0
    _
  %s6 = ssub.s32 1, %s4
  %s7 = scalar_select 0, %s6, %s4
  $region1: #{tpu_custom_call.1} parent=0
    #allocation2 [shape = 'u8[16384]{0}', space=vmem, size = 0x4000, scoped, tag = 'output window, operand 0, single buffered']
    #allocation3 [shape = 's32[1]{0}', space=sflag, size = 0x4, scoped, tag = 'scoped memory for tpu_custom_call.1']
    %8 = vsyncpa [#allocation3], 0
    // Predicated region
    $region2: #{tpu_custom_call.1} parent=1 // pred_check
      _
    $region3: #{tpu_custom_call.1} parent=1 // pred_check_branch
      %10 = sbr.rel (0) target = $region5
    $region4: #{tpu_custom_call.1} parent=1 // pred_region
      _
    $region5: #{tpu_custom_call.1} parent=1 // pred_fallthru
      _
    // Predicated region
    $region6: #{tpu_custom_call.1} parent=1 // pred_check
      _
    $region7: #{tpu_custom_call.1} parent=1 // pred_check_branch
      %12 = sbr.rel (0) target = $region9
    $region8: #{tpu_custom_call.1} parent=1 // pred_region
      _
    $region9: #{tpu_custom_call.1} parent=1 // pred_fallthru
      _
    // Predicated region
    $region10: #{tpu_custom_call.1} parent=1 // pred_check
      _
    $region11: #{tpu_custom_call.1} parent=1 // pred_check_branch
      %14 = sbr.rel (0) target = $region13
    $region12: #{tpu_custom_call.1} parent=1 // pred_region
      _
    $region13: #{tpu_custom_call.1} parent=1 // pred_fallthru
      _
    %v16 = vld [vmem:[%s0] sm:$0xff]
    %v17 = vld [vmem:[%s0 + $0x8] sm:$0xff]
    %v18 = vld [vmem:[%s0 + $0x10] sm:$0xff]
    %v19 = vld [vmem:[%s0 + $0x18] sm:$0xff]
    %v20 = vld [vmem:[%s0 + $0x20] sm:$0xff]
    %v21 = vld [vmem:[%s0 + $0x28] sm:$0xff]
    %v22 = vld [vmem:[%s0 + $0x30] sm:$0xff]
    %v23 = vld [vmem:[%s0 + $0x38] sm:$0xff]
    %v24 = vld [vmem:[%s0 + $0x40] sm:$0xff]
    %v25 = vld [vmem:[%s0 + $0x48] sm:$0xff]
    %v26 = vld [vmem:[%s0 + $0x50] sm:$0xff]
    %v27 = vld [vmem:[%s0 + $0x58] sm:$0xff]
    %v28 = vld [vmem:[%s0 + $0x60] sm:$0xff]
    %v29 = vld [vmem:[%s0 + $0x68] sm:$0xff]
    %v30 = vld [vmem:[%s0 + $0x70] sm:$0xff]
    %v31 = vld [vmem:[%s0 + $0x78] sm:$0xff]
    %v32 = vld [vmem:[%s0 + $0x80] sm:$0xff]
    %v33 = vld [vmem:[%s0 + $0x88] sm:$0xff]
    %v34 = vld [vmem:[%s0 + $0x90] sm:$0xff]
    %v35 = vld [vmem:[%s0 + $0x98] sm:$0xff]
    %v36 = vld [vmem:[%s0 + $0xa0] sm:$0xff]
    %v37 = vld [vmem:[%s0 + $0xa8] sm:$0xff]
    %v38 = vld [vmem:[%s0 + $0xb0] sm:$0xff]
    %v39 = vld [vmem:[%s0 + $0xb8] sm:$0xff]
    %v40 = vld [vmem:[%s0 + $0xc0] sm:$0xff]
    %v41 = vld [vmem:[%s0 + $0xc8] sm:$0xff]
    %v42 = vld [vmem:[%s0 + $0xd0] sm:$0xff]
    %v43 = vld [vmem:[%s0 + $0xd8] sm:$0xff]
    %v44 = vld [vmem:[%s0 + $0xe0] sm:$0xff]
    %v45 = vld [vmem:[%s0 + $0xe8] sm:$0xff]
    %v46 = vld [vmem:[%s0 + $0xf0] sm:$0xff]
    %v47 = vld [vmem:[%s0 + $0xf8] sm:$0xff]
    %v48 = vld [vmem:[%s1] sm:$0xf]
    %v49 = vld [vmem:[%s1 + $0x4] sm:$0xf]
    %v50 = vld [vmem:[%s1 + $0x8] sm:$0xf]
    %v51 = vld [vmem:[%s1 + $0xc] sm:$0xf]
    %v52 = vld [vmem:[%s1 + $0x10] sm:$0xf]
    %v53 = vld [vmem:[%s1 + $0x14] sm:$0xf]
    %v54 = vld [vmem:[%s1 + $0x18] sm:$0xf]
    %v55 = vld [vmem:[%s1 + $0x1c] sm:$0xf]
    %v56 = vld [vmem:[%s1 + $0x20] sm:$0xf]
    %v57 = vld [vmem:[%s1 + $0x24] sm:$0xf]
    %v58 = vld [vmem:[%s1 + $0x28] sm:$0xf]
    %v59 = vld [vmem:[%s1 + $0x2c] sm:$0xf]
    %v60 = vld [vmem:[%s1 + $0x30] sm:$0xf]
    %v61 = vld [vmem:[%s1 + $0x34] sm:$0xf]
    %v62 = vld [vmem:[%s1 + $0x38] sm:$0xf]
    %v63 = vld [vmem:[%s1 + $0x3c] sm:$0xf]
    %v64 = vld [vmem:[%s1 + $0x40] sm:$0xf]
    %v65 = vld [vmem:[%s1 + $0x44] sm:$0xf]
    %v66 = vld [vmem:[%s1 + $0x48] sm:$0xf]
    %v67 = vld [vmem:[%s1 + $0x4c] sm:$0xf]
    %v68 = vld [vmem:[%s1 + $0x50] sm:$0xf]
    %v69 = vld [vmem:[%s1 + $0x54] sm:$0xf]
    %v70 = vld [vmem:[%s1 + $0x58] sm:$0xf]
    %v71 = vld [vmem:[%s1 + $0x5c] sm:$0xf]
    %v72 = vld [vmem:[%s1 + $0x60] sm:$0xf]
    %v73 = vld [vmem:[%s1 + $0x64] sm:$0xf]
    %v74 = vld [vmem:[%s1 + $0x68] sm:$0xf]
    %v75 = vld [vmem:[%s1 + $0x6c] sm:$0xf]
    %v76 = vld [vmem:[%s1 + $0x70] sm:$0xf]
    %v77 = vld [vmem:[%s1 + $0x74] sm:$0xf]
    %v78 = vld [vmem:[%s1 + $0x78] sm:$0xf]
    %v79 = vld [vmem:[%s1 + $0x7c] sm:$0xf]
    %v80 = vld [vmem:[%s1 + $0x80] sm:$0xf]
    %v81 = vld [vmem:[%s1 + $0x84] sm:$0xf]
    %v82 = vld [vmem:[%s1 + $0x88] sm:$0xf]
    %v83 = vld [vmem:[%s1 + $0x8c] sm:$0xf]
    %v84 = vld [vmem:[%s1 + $0x90] sm:$0xf]
    %v85 = vld [vmem:[%s1 + $0x94] sm:$0xf]
    %v86 = vld [vmem:[%s1 + $0x98] sm:$0xf]
    %v87 = vld [vmem:[%s1 + $0x9c] sm:$0xf]
    %v88 = vld [vmem:[%s1 + $0xa0] sm:$0xf]
    %v89 = vld [vmem:[%s1 + $0xa4] sm:$0xf]
    %v90 = vld [vmem:[%s1 + $0xa8] sm:$0xf]
    %v91 = vld [vmem:[%s1 + $0xac] sm:$0xf]
    %v92 = vld [vmem:[%s1 + $0xb0] sm:$0xf]
    %v93 = vld [vmem:[%s1 + $0xb4] sm:$0xf]
    %v94 = vld [vmem:[%s1 + $0xb8] sm:$0xf]
    %v95 = vld [vmem:[%s1 + $0xbc] sm:$0xf]
    %v96 = vld [vmem:[%s1 + $0xc0] sm:$0xf]
    %v97 = vld [vmem:[%s1 + $0xc4] sm:$0xf]
    %v98 = vld [vmem:[%s1 + $0xc8] sm:$0xf]
    %v99 = vld [vmem:[%s1 + $0xcc] sm:$0xf]
    %v100 = vld [vmem:[%s1 + $0xd0] sm:$0xf]
    %v101 = vld [vmem:[%s1 + $0xd4] sm:$0xf]
    %v102 = vld [vmem:[%s1 + $0xd8] sm:$0xf]
    %v103 = vld [vmem:[%s1 + $0xdc] sm:$0xf]
    %v104 = vld [vmem:[%s1 + $0xe0] sm:$0xf]
    %v105 = vld [vmem:[%s1 + $0xe4] sm:$0xf]
    %v106 = vld [vmem:[%s1 + $0xe8] sm:$0xf]
    %v107 = vld [vmem:[%s1 + $0xec] sm:$0xf]
    %v108 = vld [vmem:[%s1 + $0xf0] sm:$0xf]
    %v109 = vld [vmem:[%s1 + $0xf4] sm:$0xf]
    %v110 = vld [vmem:[%s1 + $0xf8] sm:$0xf]
    %v111 = vld [vmem:[%s1 + $0xfc] sm:$0xf]
    %v112 = vld [vmem:[%s1 + $0x100] sm:$0xf]
    %v113 = vld [vmem:[%s1 + $0x104] sm:$0xf]
    %v114 = vld [vmem:[%s1 + $0x108] sm:$0xf]
    %v115 = vld [vmem:[%s1 + $0x10c] sm:$0xf]
    %v116 = vld [vmem:[%s1 + $0x110] sm:$0xf]
    %v117 = vld [vmem:[%s1 + $0x114] sm:$0xf]
    %v118 = vld [vmem:[%s1 + $0x118] sm:$0xf]
    %v119 = vld [vmem:[%s1 + $0x11c] sm:$0xf]
    %v120 = vld [vmem:[%s1 + $0x120] sm:$0xf]
    %v121 = vld [vmem:[%s1 + $0x124] sm:$0xf]
    %v122 = vld [vmem:[%s1 + $0x128] sm:$0xf]
    %v123 = vld [vmem:[%s1 + $0x12c] sm:$0xf]
    %v124 = vld [vmem:[%s1 + $0x130] sm:$0xf]
    %v125 = vld [vmem:[%s1 + $0x134] sm:$0xf]
    %v126 = vld [vmem:[%s1 + $0x138] sm:$0xf]
    %v127 = vld [vmem:[%s1 + $0x13c] sm:$0xf]
    %v128 = vld [vmem:[%s1 + $0x140] sm:$0xf]
    %v129 = vld [vmem:[%s1 + $0x144] sm:$0xf]
    %v130 = vld [vmem:[%s1 + $0x148] sm:$0xf]
    %v131 = vld [vmem:[%s1 + $0x14c] sm:$0xf]
    %v132 = vld [vmem:[%s1 + $0x150] sm:$0xf]
    %v133 = vld [vmem:[%s1 + $0x154] sm:$0xf]
    %v134 = vld [vmem:[%s1 + $0x158] sm:$0xf]
    %v135 = vld [vmem:[%s1 + $0x15c] sm:$0xf]
    %v136 = vld [vmem:[%s1 + $0x160] sm:$0xf]
    %v137 = vld [vmem:[%s1 + $0x164] sm:$0xf]
    %v138 = vld [vmem:[%s1 + $0x168] sm:$0xf]
    %v139 = vld [vmem:[%s1 + $0x16c] sm:$0xf]
    %v140 = vld [vmem:[%s1 + $0x170] sm:$0xf]
    %v141 = vld [vmem:[%s1 + $0x174] sm:$0xf]
    %v142 = vld [vmem:[%s1 + $0x178] sm:$0xf]
    %v143 = vld [vmem:[%s1 + $0x17c] sm:$0xf]
    %v144 = vld [vmem:[%s1 + $0x180] sm:$0xf]
    %v145 = vld [vmem:[%s1 + $0x184] sm:$0xf]
    %v146 = vld [vmem:[%s1 + $0x188] sm:$0xf]
    %v147 = vld [vmem:[%s1 + $0x18c] sm:$0xf]
    %v148 = vld [vmem:[%s1 + $0x190] sm:$0xf]
    %v149 = vld [vmem:[%s1 + $0x194] sm:$0xf]
    %v150 = vld [vmem:[%s1 + $0x198] sm:$0xf]
    %v151 = vld [vmem:[%s1 + $0x19c] sm:$0xf]
    %v152 = vld [vmem:[%s1 + $0x1a0] sm:$0xf]
    %v153 = vld [vmem:[%s1 + $0x1a4] sm:$0xf]
    %v154 = vld [vmem:[%s1 + $0x1a8] sm:$0xf]
    %v155 = vld [vmem:[%s1 + $0x1ac] sm:$0xf]
    %v156 = vld [vmem:[%s1 + $0x1b0] sm:$0xf]
    %v157 = vld [vmem:[%s1 + $0x1b4] sm:$0xf]
    %v158 = vld [vmem:[%s1 + $0x1b8] sm:$0xf]
    %v159 = vld [vmem:[%s1 + $0x1bc] sm:$0xf]
    %v160 = vld [vmem:[%s1 + $0x1c0] sm:$0xf]
    %v161 = vld [vmem:[%s1 + $0x1c4] sm:$0xf]
    %v162 = vld [vmem:[%s1 + $0x1c8] sm:$0xf]
    %v163 = vld [vmem:[%s1 + $0x1cc] sm:$0xf]
    %v164 = vld [vmem:[%s1 + $0x1d0] sm:$0xf]
    %v165 = vld [vmem:[%s1 + $0x1d4] sm:$0xf]
    %v166 = vld [vmem:[%s1 + $0x1d8] sm:$0xf]
    %v167 = vld [vmem:[%s1 + $0x1dc] sm:$0xf]
    %v168 = vld [vmem:[%s1 + $0x1e0] sm:$0xf]
    %v169 = vld [vmem:[%s1 + $0x1e4] sm:$0xf]
    %v170 = vld [vmem:[%s1 + $0x1e8] sm:$0xf]
    %v171 = vld [vmem:[%s1 + $0x1ec] sm:$0xf]
    %v172 = vld [vmem:[%s1 + $0x1f0] sm:$0xf]
    %v173 = vld [vmem:[%s1 + $0x1f4] sm:$0xf]
    %v174 = vld [vmem:[%s1 + $0x1f8] sm:$0xf]
    %v175 = vld [vmem:[%s1 + $0x1fc] sm:$0xf]
    %v176 = vld [vmem:[%s1 + $0x200] sm:$0xf]
    %v177 = vld [vmem:[%s1 + $0x204] sm:$0xf]
    %v178 = vld [vmem:[%s1 + $0x208] sm:$0xf]
    %v179 = vld [vmem:[%s1 + $0x20c] sm:$0xf]
    %v180 = vld [vmem:[%s1 + $0x210] sm:$0xf]
    %v181 = vld [vmem:[%s1 + $0x214] sm:$0xf]
    %v182 = vld [vmem:[%s1 + $0x218] sm:$0xf]
    %v183 = vld [vmem:[%s1 + $0x21c] sm:$0xf]
    %v184 = vld [vmem:[%s1 + $0x220] sm:$0xf]
    %v185 = vld [vmem:[%s1 + $0x224] sm:$0xf]
    %v186 = vld [vmem:[%s1 + $0x228] sm:$0xf]
    %v187 = vld [vmem:[%s1 + $0x22c] sm:$0xf]
    %v188 = vld [vmem:[%s1 + $0x230] sm:$0xf]
    %v189 = vld [vmem:[%s1 + $0x234] sm:$0xf]
    %v190 = vld [vmem:[%s1 + $0x238] sm:$0xf]
    %v191 = vld [vmem:[%s1 + $0x23c] sm:$0xf]
    %v192 = vld [vmem:[%s1 + $0x240] sm:$0xf]
    %v193 = vld [vmem:[%s1 + $0x244] sm:$0xf]
    %v194 = vld [vmem:[%s1 + $0x248] sm:$0xf]
    %v195 = vld [vmem:[%s1 + $0x24c] sm:$0xf]
    %v196 = vld [vmem:[%s1 + $0x250] sm:$0xf]
    %v197 = vld [vmem:[%s1 + $0x254] sm:$0xf]
    %v198 = vld [vmem:[%s1 + $0x258] sm:$0xf]
    %v199 = vld [vmem:[%s1 + $0x25c] sm:$0xf]
    %v200 = vld [vmem:[%s1 + $0x260] sm:$0xf]
    %v201 = vld [vmem:[%s1 + $0x264] sm:$0xf]
    %v202 = vld [vmem:[%s1 + $0x268] sm:$0xf]
    %v203 = vld [vmem:[%s1 + $0x26c] sm:$0xf]
    %v204 = vld [vmem:[%s1 + $0x270] sm:$0xf]
    %v205 = vld [vmem:[%s1 + $0x274] sm:$0xf]
    %v206 = vld [vmem:[%s1 + $0x278] sm:$0xf]
    %v207 = vld [vmem:[%s1 + $0x27c] sm:$0xf]
    %v208 = vld [vmem:[%s1 + $0x280] sm:$0xf]
    %v209 = vld [vmem:[%s1 + $0x284] sm:$0xf]
    %v210 = vld [vmem:[%s1 + $0x288] sm:$0xf]
    %v211 = vld [vmem:[%s1 + $0x28c] sm:$0xf]
    %v212 = vld [vmem:[%s1 + $0x290] sm:$0xf]
    %v213 = vld [vmem:[%s1 + $0x294] sm:$0xf]
    %v214 = vld [vmem:[%s1 + $0x298] sm:$0xf]
    %v215 = vld [vmem:[%s1 + $0x29c] sm:$0xf]
    %v216 = vld [vmem:[%s1 + $0x2a0] sm:$0xf]
    %v217 = vld [vmem:[%s1 + $0x2a4] sm:$0xf]
    %v218 = vld [vmem:[%s1 + $0x2a8] sm:$0xf]
    %v219 = vld [vmem:[%s1 + $0x2ac] sm:$0xf]
    %v220 = vld [vmem:[%s1 + $0x2b0] sm:$0xf]
    %v221 = vld [vmem:[%s1 + $0x2b4] sm:$0xf]
    %v222 = vld [vmem:[%s1 + $0x2b8] sm:$0xf]
    %v223 = vld [vmem:[%s1 + $0x2bc] sm:$0xf]
    %v224 = vld [vmem:[%s1 + $0x2c0] sm:$0xf]
    %v225 = vld [vmem:[%s1 + $0x2c4] sm:$0xf]
    %v226 = vld [vmem:[%s1 + $0x2c8] sm:$0xf]
    %v227 = vld [vmem:[%s1 + $0x2cc] sm:$0xf]
    %v228 = vld [vmem:[%s1 + $0x2d0] sm:$0xf]
    %v229 = vld [vmem:[%s1 + $0x2d4] sm:$0xf]
    %v230 = vld [vmem:[%s1 + $0x2d8] sm:$0xf]
    %v231 = vld [vmem:[%s1 + $0x2dc] sm:$0xf]
    %v232 = vld [vmem:[%s1 + $0x2e0] sm:$0xf]
    %v233 = vld [vmem:[%s1 + $0x2e4] sm:$0xf]
    %v234 = vld [vmem:[%s1 + $0x2e8] sm:$0xf]
    %v235 = vld [vmem:[%s1 + $0x2ec] sm:$0xf]
    %v236 = vld [vmem:[%s1 + $0x2f0] sm:$0xf]
    %v237 = vld [vmem:[%s1 + $0x2f4] sm:$0xf]
    %v238 = vld [vmem:[%s1 + $0x2f8] sm:$0xf]
    %v239 = vld [vmem:[%s1 + $0x2fc] sm:$0xf]
    %v240 = vld [vmem:[%s1 + $0x300] sm:$0xf]
    %v241 = vld [vmem:[%s1 + $0x304] sm:$0xf]
    %v242 = vld [vmem:[%s1 + $0x308] sm:$0xf]
    %v243 = vld [vmem:[%s1 + $0x30c] sm:$0xf]
    %v244 = vld [vmem:[%s1 + $0x310] sm:$0xf]
    %v245 = vld [vmem:[%s1 + $0x314] sm:$0xf]
    %v246 = vld [vmem:[%s1 + $0x318] sm:$0xf]
    %v247 = vld [vmem:[%s1 + $0x31c] sm:$0xf]
    %v248 = vld [vmem:[%s1 + $0x320] sm:$0xf]
    %v249 = vld [vmem:[%s1 + $0x324] sm:$0xf]
    %v250 = vld [vmem:[%s1 + $0x328] sm:$0xf]
    %v251 = vld [vmem:[%s1 + $0x32c] sm:$0xf]
    %v252 = vld [vmem:[%s1 + $0x330] sm:$0xf]
    %v253 = vld [vmem:[%s1 + $0x334] sm:$0xf]
    %v254 = vld [vmem:[%s1 + $0x338] sm:$0xf]
    %v255 = vld [vmem:[%s1 + $0x33c] sm:$0xf]
    %v256 = vld [vmem:[%s1 + $0x340] sm:$0xf]
    %v257 = vld [vmem:[%s1 + $0x344] sm:$0xf]
    %v258 = vld [vmem:[%s1 + $0x348] sm:$0xf]
    %v259 = vld [vmem:[%s1 + $0x34c] sm:$0xf]
    %v260 = vld [vmem:[%s1 + $0x350] sm:$0xf]
    %v261 = vld [vmem:[%s1 + $0x354] sm:$0xf]
    %v262 = vld [vmem:[%s1 + $0x358] sm:$0xf]
    %v263 = vld [vmem:[%s1 + $0x35c] sm:$0xf]
    %v264 = vld [vmem:[%s1 + $0x360] sm:$0xf]
    %v265 = vld [vmem:[%s1 + $0x364] sm:$0xf]
    %v266 = vld [vmem:[%s1 + $0x368] sm:$0xf]
    %v267 = vld [vmem:[%s1 + $0x36c] sm:$0xf]
    %v268 = vld [vmem:[%s1 + $0x370] sm:$0xf]
    %v269 = vld [vmem:[%s1 + $0x374] sm:$0xf]
    %v270 = vld [vmem:[%s1 + $0x378] sm:$0xf]
    %v271 = vld [vmem:[%s1 + $0x37c] sm:$0xf]
    %v272 = vld [vmem:[%s1 + $0x380] sm:$0xf]
    %v273 = vld [vmem:[%s1 + $0x384] sm:$0xf]
    %v274 = vld [vmem:[%s1 + $0x388] sm:$0xf]
    %v275 = vld [vmem:[%s1 + $0x38c] sm:$0xf]
    %v276 = vld [vmem:[%s1 + $0x390] sm:$0xf]
    %v277 = vld [vmem:[%s1 + $0x394] sm:$0xf]
    %v278 = vld [vmem:[%s1 + $0x398] sm:$0xf]
    %v279 = vld [vmem:[%s1 + $0x39c] sm:$0xf]
    %v280 = vld [vmem:[%s1 + $0x3a0] sm:$0xf]
    %v281 = vld [vmem:[%s1 + $0x3a4] sm:$0xf]
    %v282 = vld [vmem:[%s1 + $0x3a8] sm:$0xf]
    %v283 = vld [vmem:[%s1 + $0x3ac] sm:$0xf]
    %v284 = vld [vmem:[%s1 + $0x3b0] sm:$0xf]
    %v285 = vld [vmem:[%s1 + $0x3b4] sm:$0xf]
    %v286 = vld [vmem:[%s1 + $0x3b8] sm:$0xf]
    %v287 = vld [vmem:[%s1 + $0x3bc] sm:$0xf]
    %v288 = vld [vmem:[%s1 + $0x3c0] sm:$0xf]
    %v289 = vld [vmem:[%s1 + $0x3c4] sm:$0xf]
    %v290 = vld [vmem:[%s1 + $0x3c8] sm:$0xf]
    %v291 = vld [vmem:[%s1 + $0x3cc] sm:$0xf]
    %v292 = vld [vmem:[%s1 + $0x3d0] sm:$0xf]
    %v293 = vld [vmem:[%s1 + $0x3d4] sm:$0xf]
    %v294 = vld [vmem:[%s1 + $0x3d8] sm:$0xf]
    %v295 = vld [vmem:[%s1 + $0x3dc] sm:$0xf]
    %v296 = vld [vmem:[%s1 + $0x3e0] sm:$0xf]
    %v297 = vld [vmem:[%s1 + $0x3e4] sm:$0xf]
    %v298 = vld [vmem:[%s1 + $0x3e8] sm:$0xf]
    %v299 = vld [vmem:[%s1 + $0x3ec] sm:$0xf]
    %v300 = vld [vmem:[%s1 + $0x3f0] sm:$0xf]
    %v301 = vld [vmem:[%s1 + $0x3f4] sm:$0xf]
    %v302 = vld [vmem:[%s1 + $0x3f8] sm:$0xf]
    %v303 = vld [vmem:[%s1 + $0x3fc] sm:$0xf]
    %v304 = vld [vmem:[%s2] sm:$0x1]
    %v306 = vlaneseq
    %v307 = vshrl.u32 %v306, 7
    %v308 = vsub.s32 0, %v307
    %v309 = vrot.slane %v304, %v308
    %v343 = vunpack.c.l.b16 %v16
    %v344 = vunpack.c.h.b16 %v16
    %v345 = vunpack.c.l.b16 %v17
    %v346 = vunpack.c.h.b16 %v17
    %v347 = vunpack.c.l.b16 %v18
    %v348 = vunpack.c.h.b16 %v18
    %v349 = vunpack.c.l.b16 %v19
    %v350 = vunpack.c.h.b16 %v19
    %v351 = vunpack.c.l.b16 %v20
    %v352 = vunpack.c.h.b16 %v20
    %v353 = vunpack.c.l.b16 %v21
    %v354 = vunpack.c.h.b16 %v21
    %v355 = vunpack.c.l.b16 %v22
    %v356 = vunpack.c.h.b16 %v22
    %v357 = vunpack.c.l.b16 %v23
    %v358 = vunpack.c.h.b16 %v23
    %v359 = vunpack.c.l.b16 %v24
    %v360 = vunpack.c.h.b16 %v24
    %v361 = vunpack.c.l.b16 %v25
    %v362 = vunpack.c.h.b16 %v25
    %v363 = vunpack.c.l.b16 %v26
    %v364 = vunpack.c.h.b16 %v26
    %v365 = vunpack.c.l.b16 %v27
    %v366 = vunpack.c.h.b16 %v27
    %v367 = vunpack.c.l.b16 %v28
    %v368 = vunpack.c.h.b16 %v28
    %v369 = vunpack.c.l.b16 %v29
    %v370 = vunpack.c.h.b16 %v29
    %v371 = vunpack.c.l.b16 %v30
    %v372 = vunpack.c.h.b16 %v30
    %v373 = vunpack.c.l.b16 %v31
    %v374 = vunpack.c.h.b16 %v31
    %v375 = vunpack.c.l.b16 %v32
    %v376 = vunpack.c.h.b16 %v32
    %v377 = vunpack.c.l.b16 %v33
    %v378 = vunpack.c.h.b16 %v33
    %v379 = vunpack.c.l.b16 %v34
    %v380 = vunpack.c.h.b16 %v34
    %v381 = vunpack.c.l.b16 %v35
    %v382 = vunpack.c.h.b16 %v35
    %v383 = vunpack.c.l.b16 %v36
    %v384 = vunpack.c.h.b16 %v36
    %v385 = vunpack.c.l.b16 %v37
    %v386 = vunpack.c.h.b16 %v37
    %v387 = vunpack.c.l.b16 %v38
    %v388 = vunpack.c.h.b16 %v38
    %v389 = vunpack.c.l.b16 %v39
    %v390 = vunpack.c.h.b16 %v39
    %v391 = vunpack.c.l.b16 %v40
    %v392 = vunpack.c.h.b16 %v40
    %v393 = vunpack.c.l.b16 %v41
    %v394 = vunpack.c.h.b16 %v41
    %v395 = vunpack.c.l.b16 %v42
    %v396 = vunpack.c.h.b16 %v42
    %v397 = vunpack.c.l.b16 %v43
    %v398 = vunpack.c.h.b16 %v43
    %v399 = vunpack.c.l.b16 %v44
    %v400 = vunpack.c.h.b16 %v44
    %v401 = vunpack.c.l.b16 %v45
    %v402 = vunpack.c.h.b16 %v45
    %v403 = vunpack.c.l.b16 %v46
    %v404 = vunpack.c.h.b16 %v46
    %v405 = vunpack.c.l.b16 %v47
    %v406 = vunpack.c.h.b16 %v47
    %v407 = vpack.c.b16 %v359, %v343
    %v408 = vpack.c.b16 %v360, %v344
    %v409 = vpack.c.b16 %v361, %v345
    %v410 = vpack.c.b16 %v362, %v346
    %v411 = vpack.c.b16 %v363, %v347
    %v412 = vpack.c.b16 %v364, %v348
    %v413 = vpack.c.b16 %v365, %v349
    %v414 = vpack.c.b16 %v366, %v350
    %v415 = vpack.c.b16 %v367, %v351
    %v416 = vpack.c.b16 %v368, %v352
    %v417 = vpack.c.b16 %v369, %v353
    %v418 = vpack.c.b16 %v370, %v354
    %v419 = vpack.c.b16 %v371, %v355
    %v420 = vpack.c.b16 %v372, %v356
    %v421 = vpack.c.b16 %v373, %v357
    %v422 = vpack.c.b16 %v374, %v358
    %v423 = vpack.c.b16 %v391, %v375
    %v424 = vpack.c.b16 %v392, %v376
    %v425 = vpack.c.b16 %v393, %v377
    %v426 = vpack.c.b16 %v394, %v378
    %v427 = vpack.c.b16 %v395, %v379
    %v428 = vpack.c.b16 %v396, %v380
    %v429 = vpack.c.b16 %v397, %v381
    %v430 = vpack.c.b16 %v398, %v382
    %v431 = vpack.c.b16 %v399, %v383
    %v432 = vpack.c.b16 %v400, %v384
    %v433 = vpack.c.b16 %v401, %v385
    %v434 = vpack.c.b16 %v402, %v386
    %v435 = vpack.c.b16 %v403, %v387
    %v436 = vpack.c.b16 %v404, %v388
    %v437 = vpack.c.b16 %v405, %v389
    %v438 = vpack.c.b16 %v406, %v390
    %v727 = vunpack.c.l.b16 %v48
    %v728 = vunpack.c.l.b16 %v49
    %v729 = vunpack.c.l.b16 %v50
    %v730 = vunpack.c.l.b16 %v51
    %v731 = vunpack.c.l.b16 %v52
    %v732 = vunpack.c.l.b16 %v53
    %v733 = vunpack.c.l.b16 %v54
    %v734 = vunpack.c.l.b16 %v55
    %v735 = vunpack.c.l.b16 %v56
    %v736 = vunpack.c.l.b16 %v57
    %v737 = vunpack.c.l.b16 %v58
    %v738 = vunpack.c.l.b16 %v59
    %v739 = vunpack.c.l.b16 %v60
    %v740 = vunpack.c.l.b16 %v61
    %v741 = vunpack.c.l.b16 %v62
    %v742 = vunpack.c.l.b16 %v63
    %v743 = vunpack.c.l.b16 %v64
    %v744 = vunpack.c.l.b16 %v65
    %v745 = vunpack.c.l.b16 %v66
    %v746 = vunpack.c.l.b16 %v67
    %v747 = vunpack.c.l.b16 %v68
    %v748 = vunpack.c.l.b16 %v69
    %v749 = vunpack.c.l.b16 %v70
    %v750 = vunpack.c.l.b16 %v71
    %v751 = vunpack.c.l.b16 %v72
    %v752 = vunpack.c.l.b16 %v73
    %v753 = vunpack.c.l.b16 %v74
    %v754 = vunpack.c.l.b16 %v75
    %v755 = vunpack.c.l.b16 %v76
    %v756 = vunpack.c.l.b16 %v77
    %v757 = vunpack.c.l.b16 %v78
    %v758 = vunpack.c.l.b16 %v79
    %v759 = vunpack.c.l.b16 %v80
    %v760 = vunpack.c.l.b16 %v81
    %v761 = vunpack.c.l.b16 %v82
    %v762 = vunpack.c.l.b16 %v83
    %v763 = vunpack.c.l.b16 %v84
    %v764 = vunpack.c.l.b16 %v85
    %v765 = vunpack.c.l.b16 %v86
    %v766 = vunpack.c.l.b16 %v87
    %v767 = vunpack.c.l.b16 %v88
    %v768 = vunpack.c.l.b16 %v89
    %v769 = vunpack.c.l.b16 %v90
    %v770 = vunpack.c.l.b16 %v91
    %v771 = vunpack.c.l.b16 %v92
    %v772 = vunpack.c.l.b16 %v93
    %v773 = vunpack.c.l.b16 %v94
    %v774 = vunpack.c.l.b16 %v95
    %v775 = vunpack.c.l.b16 %v96
    %v776 = vunpack.c.l.b16 %v97
    %v777 = vunpack.c.l.b16 %v98
    %v778 = vunpack.c.l.b16 %v99
    %v779 = vunpack.c.l.b16 %v100
    %v780 = vunpack.c.l.b16 %v101
    %v781 = vunpack.c.l.b16 %v102
    %v782 = vunpack.c.l.b16 %v103
    %v783 = vunpack.c.l.b16 %v104
    %v784 = vunpack.c.l.b16 %v105
    %v785 = vunpack.c.l.b16 %v106
    %v786 = vunpack.c.l.b16 %v107
    %v787 = vunpack.c.l.b16 %v108
    %v788 = vunpack.c.l.b16 %v109
    %v789 = vunpack.c.l.b16 %v110
    %v790 = vunpack.c.l.b16 %v111
    %v791 = vunpack.c.l.b16 %v112
    %v792 = vunpack.c.l.b16 %v113
    %v793 = vunpack.c.l.b16 %v114
    %v794 = vunpack.c.l.b16 %v115
    %v795 = vunpack.c.l.b16 %v116
    %v796 = vunpack.c.l.b16 %v117
    %v797 = vunpack.c.l.b16 %v118
    %v798 = vunpack.c.l.b16 %v119
    %v799 = vunpack.c.l.b16 %v120
    %v800 = vunpack.c.l.b16 %v121
    %v801 = vunpack.c.l.b16 %v122
    %v802 = vunpack.c.l.b16 %v123
    %v803 = vunpack.c.l.b16 %v124
    %v804 = vunpack.c.l.b16 %v125
    %v805 = vunpack.c.l.b16 %v126
    %v806 = vunpack.c.l.b16 %v127
    %v807 = vunpack.c.l.b16 %v128
    %v808 = vunpack.c.l.b16 %v129
    %v809 = vunpack.c.l.b16 %v130
    %v810 = vunpack.c.l.b16 %v131
    %v811 = vunpack.c.l.b16 %v132
    %v812 = vunpack.c.l.b16 %v133
    %v813 = vunpack.c.l.b16 %v134
    %v814 = vunpack.c.l.b16 %v135
    %v815 = vunpack.c.l.b16 %v136
    %v816 = vunpack.c.l.b16 %v137
    %v817 = vunpack.c.l.b16 %v138
    %v818 = vunpack.c.l.b16 %v139
    %v819 = vunpack.c.l.b16 %v140
    %v820 = vunpack.c.l.b16 %v141
    %v821 = vunpack.c.l.b16 %v142
    %v822 = vunpack.c.l.b16 %v143
    %v823 = vunpack.c.l.b16 %v144
    %v824 = vunpack.c.l.b16 %v145
    %v825 = vunpack.c.l.b16 %v146
    %v826 = vunpack.c.l.b16 %v147
    %v827 = vunpack.c.l.b16 %v148
    %v828 = vunpack.c.l.b16 %v149
    %v829 = vunpack.c.l.b16 %v150
    %v830 = vunpack.c.l.b16 %v151
    %v831 = vunpack.c.l.b16 %v152
    %v832 = vunpack.c.l.b16 %v153
    %v833 = vunpack.c.l.b16 %v154
    %v834 = vunpack.c.l.b16 %v155
    %v835 = vunpack.c.l.b16 %v156
    %v836 = vunpack.c.l.b16 %v157
    %v837 = vunpack.c.l.b16 %v158
    %v838 = vunpack.c.l.b16 %v159
    %v839 = vunpack.c.l.b16 %v160
    %v840 = vunpack.c.l.b16 %v161
    %v841 = vunpack.c.l.b16 %v162
    %v842 = vunpack.c.l.b16 %v163
    %v843 = vunpack.c.l.b16 %v164
    %v844 = vunpack.c.l.b16 %v165
    %v845 = vunpack.c.l.b16 %v166
    %v846 = vunpack.c.l.b16 %v167
    %v847 = vunpack.c.l.b16 %v168
    %v848 = vunpack.c.l.b16 %v169
    %v849 = vunpack.c.l.b16 %v170
    %v850 = vunpack.c.l.b16 %v171
    %v851 = vunpack.c.l.b16 %v172
    %v852 = vunpack.c.l.b16 %v173
    %v853 = vunpack.c.l.b16 %v174
    %v854 = vunpack.c.l.b16 %v175
    %v855 = vunpack.c.l.b16 %v176
    %v856 = vunpack.c.l.b16 %v177
    %v857 = vunpack.c.l.b16 %v178
    %v858 = vunpack.c.l.b16 %v179
    %v859 = vunpack.c.l.b16 %v180
    %v860 = vunpack.c.l.b16 %v181
    %v861 = vunpack.c.l.b16 %v182
    %v862 = vunpack.c.l.b16 %v183
    %v863 = vunpack.c.l.b16 %v184
    %v864 = vunpack.c.l.b16 %v185
    %v865 = vunpack.c.l.b16 %v186
    %v866 = vunpack.c.l.b16 %v187
    %v867 = vunpack.c.l.b16 %v188
    %v868 = vunpack.c.l.b16 %v189
    %v869 = vunpack.c.l.b16 %v190
    %v870 = vunpack.c.l.b16 %v191
    %v871 = vunpack.c.l.b16 %v192
    %v872 = vunpack.c.l.b16 %v193
    %v873 = vunpack.c.l.b16 %v194
    %v874 = vunpack.c.l.b16 %v195
    %v875 = vunpack.c.l.b16 %v196
    %v876 = vunpack.c.l.b16 %v197
    %v877 = vunpack.c.l.b16 %v198
    %v878 = vunpack.c.l.b16 %v199
    %v879 = vunpack.c.l.b16 %v200
    %v880 = vunpack.c.l.b16 %v201
    %v881 = vunpack.c.l.b16 %v202
    %v882 = vunpack.c.l.b16 %v203
    %v883 = vunpack.c.l.b16 %v204
    %v884 = vunpack.c.l.b16 %v205
    %v885 = vunpack.c.l.b16 %v206
    %v886 = vunpack.c.l.b16 %v207
    %v887 = vunpack.c.l.b16 %v208
    %v888 = vunpack.c.l.b16 %v209
    %v889 = vunpack.c.l.b16 %v210
    %v890 = vunpack.c.l.b16 %v211
    %v891 = vunpack.c.l.b16 %v212
    %v892 = vunpack.c.l.b16 %v213
    %v893 = vunpack.c.l.b16 %v214
    %v894 = vunpack.c.l.b16 %v215
    %v895 = vunpack.c.l.b16 %v216
    %v896 = vunpack.c.l.b16 %v217
    %v897 = vunpack.c.l.b16 %v218
    %v898 = vunpack.c.l.b16 %v219
    %v899 = vunpack.c.l.b16 %v220
    %v900 = vunpack.c.l.b16 %v221
    %v901 = vunpack.c.l.b16 %v222
    %v902 = vunpack.c.l.b16 %v223
    %v903 = vunpack.c.l.b16 %v224
    %v904 = vunpack.c.l.b16 %v225
    %v905 = vunpack.c.l.b16 %v226
    %v906 = vunpack.c.l.b16 %v227
    %v907 = vunpack.c.l.b16 %v228
    %v908 = vunpack.c.l.b16 %v229
    %v909 = vunpack.c.l.b16 %v230
    %v910 = vunpack.c.l.b16 %v231
    %v911 = vunpack.c.l.b16 %v232
    %v912 = vunpack.c.l.b16 %v233
    %v913 = vunpack.c.l.b16 %v234
    %v914 = vunpack.c.l.b16 %v235
    %v915 = vunpack.c.l.b16 %v236
    %v916 = vunpack.c.l.b16 %v237
    %v917 = vunpack.c.l.b16 %v238
    %v918 = vunpack.c.l.b16 %v239
    %v919 = vunpack.c.l.b16 %v240
    %v920 = vunpack.c.l.b16 %v241
    %v921 = vunpack.c.l.b16 %v242
    %v922 = vunpack.c.l.b16 %v243
    %v923 = vunpack.c.l.b16 %v244
    %v924 = vunpack.c.l.b16 %v245
    %v925 = vunpack.c.l.b16 %v246
    %v926 = vunpack.c.l.b16 %v247
    %v927 = vunpack.c.l.b16 %v248
    %v928 = vunpack.c.l.b16 %v249
    %v929 = vunpack.c.l.b16 %v250
    %v930 = vunpack.c.l.b16 %v251
    %v931 = vunpack.c.l.b16 %v252
    %v932 = vunpack.c.l.b16 %v253
    %v933 = vunpack.c.l.b16 %v254
    %v934 = vunpack.c.l.b16 %v255
    %v935 = vunpack.c.l.b16 %v256
    %v936 = vunpack.c.l.b16 %v257
    %v937 = vunpack.c.l.b16 %v258
    %v938 = vunpack.c.l.b16 %v259
    %v939 = vunpack.c.l.b16 %v260
    %v940 = vunpack.c.l.b16 %v261
    %v941 = vunpack.c.l.b16 %v262
    %v942 = vunpack.c.l.b16 %v263
    %v943 = vunpack.c.l.b16 %v264
    %v944 = vunpack.c.l.b16 %v265
    %v945 = vunpack.c.l.b16 %v266
    %v946 = vunpack.c.l.b16 %v267
    %v947 = vunpack.c.l.b16 %v268
    %v948 = vunpack.c.l.b16 %v269
    %v949 = vunpack.c.l.b16 %v270
    %v950 = vunpack.c.l.b16 %v271
    %v951 = vunpack.c.l.b16 %v272
    %v952 = vunpack.c.l.b16 %v273
    %v953 = vunpack.c.l.b16 %v274
    %v954 = vunpack.c.l.b16 %v275
    %v955 = vunpack.c.l.b16 %v276
    %v956 = vunpack.c.l.b16 %v277
    %v957 = vunpack.c.l.b16 %v278
    %v958 = vunpack.c.l.b16 %v279
    %v959 = vunpack.c.l.b16 %v280
    %v960 = vunpack.c.l.b16 %v281
    %v961 = vunpack.c.l.b16 %v282
    %v962 = vunpack.c.l.b16 %v283
    %v963 = vunpack.c.l.b16 %v284
    %v964 = vunpack.c.l.b16 %v285
    %v965 = vunpack.c.l.b16 %v286
    %v966 = vunpack.c.l.b16 %v287
    %v967 = vunpack.c.l.b16 %v288
    %v968 = vunpack.c.l.b16 %v289
    %v969 = vunpack.c.l.b16 %v290
    %v970 = vunpack.c.l.b16 %v291
    %v971 = vunpack.c.l.b16 %v292
    %v972 = vunpack.c.l.b16 %v293
    %v973 = vunpack.c.l.b16 %v294
    %v974 = vunpack.c.l.b16 %v295
    %v975 = vunpack.c.l.b16 %v296
    %v976 = vunpack.c.l.b16 %v297
    %v977 = vunpack.c.l.b16 %v298
    %v978 = vunpack.c.l.b16 %v299
    %v979 = vunpack.c.l.b16 %v300
    %v980 = vunpack.c.l.b16 %v301
    %v981 = vunpack.c.l.b16 %v302
    %v982 = vunpack.c.l.b16 %v303
    %v983 = vpack.c.b16 %v728, %v727
    %v984 = vpack.c.b16 %v730, %v729
    %v985 = vpack.c.b16 %v732, %v731
    %v986 = vpack.c.b16 %v734, %v733
    %v987 = vpack.c.b16 %v736, %v735
    %v988 = vpack.c.b16 %v738, %v737
    %v989 = vpack.c.b16 %v740, %v739
    %v990 = vpack.c.b16 %v742, %v741
    %v991 = vpack.c.b16 %v744, %v743
    %v992 = vpack.c.b16 %v746, %v745
    %v993 = vpack.c.b16 %v748, %v747
    %v994 = vpack.c.b16 %v750, %v749
    %v995 = vpack.c.b16 %v752, %v751
    %v996 = vpack.c.b16 %v754, %v753
    %v997 = vpack.c.b16 %v756, %v755
    %v998 = vpack.c.b16 %v758, %v757
    %v999 = vpack.c.b16 %v760, %v759
    %v1000 = vpack.c.b16 %v762, %v761
    %v1001 = vpack.c.b16 %v764, %v763
    %v1002 = vpack.c.b16 %v766, %v765
    %v1003 = vpack.c.b16 %v768, %v767
    %v1004 = vpack.c.b16 %v770, %v769
    %v1005 = vpack.c.b16 %v772, %v771
    %v1006 = vpack.c.b16 %v774, %v773
    %v1007 = vpack.c.b16 %v776, %v775
    %v1008 = vpack.c.b16 %v778, %v777
    %v1009 = vpack.c.b16 %v780, %v779
    %v1010 = vpack.c.b16 %v782, %v781
    %v1011 = vpack.c.b16 %v784, %v783
    %v1012 = vpack.c.b16 %v786, %v785
    %v1013 = vpack.c.b16 %v788, %v787
    %v1014 = vpack.c.b16 %v790, %v789
    %v1015 = vpack.c.b16 %v792, %v791
    %v1016 = vpack.c.b16 %v794, %v793
    %v1017 = vpack.c.b16 %v796, %v795
    %v1018 = vpack.c.b16 %v798, %v797
    %v1019 = vpack.c.b16 %v800, %v799
    %v1020 = vpack.c.b16 %v802, %v801
    %v1021 = vpack.c.b16 %v804, %v803
    %v1022 = vpack.c.b16 %v806, %v805
    %v1023 = vpack.c.b16 %v808, %v807
    %v1024 = vpack.c.b16 %v810, %v809
    %v1025 = vpack.c.b16 %v812, %v811
    %v1026 = vpack.c.b16 %v814, %v813
    %v1027 = vpack.c.b16 %v816, %v815
    %v1028 = vpack.c.b16 %v818, %v817
    %v1029 = vpack.c.b16 %v820, %v819
    %v1030 = vpack.c.b16 %v822, %v821
    %v1031 = vpack.c.b16 %v824, %v823
    %v1032 = vpack.c.b16 %v826, %v825
    %v1033 = vpack.c.b16 %v828, %v827
    %v1034 = vpack.c.b16 %v830, %v829
    %v1035 = vpack.c.b16 %v832, %v831
    %v1036 = vpack.c.b16 %v834, %v833
    %v1037 = vpack.c.b16 %v836, %v835
    %v1038 = vpack.c.b16 %v838, %v837
    %v1039 = vpack.c.b16 %v840, %v839
    %v1040 = vpack.c.b16 %v842, %v841
    %v1041 = vpack.c.b16 %v844, %v843
    %v1042 = vpack.c.b16 %v846, %v845
    %v1043 = vpack.c.b16 %v848, %v847
    %v1044 = vpack.c.b16 %v850, %v849
    %v1045 = vpack.c.b16 %v852, %v851
    %v1046 = vpack.c.b16 %v854, %v853
    %v1047 = vpack.c.b16 %v856, %v855
    %v1048 = vpack.c.b16 %v858, %v857
    %v1049 = vpack.c.b16 %v860, %v859
    %v1050 = vpack.c.b16 %v862, %v861
    %v1051 = vpack.c.b16 %v864, %v863
    %v1052 = vpack.c.b16 %v866, %v865
    %v1053 = vpack.c.b16 %v868, %v867
    %v1054 = vpack.c.b16 %v870, %v869
    %v1055 = vpack.c.b16 %v872, %v871
    %v1056 = vpack.c.b16 %v874, %v873
    %v1057 = vpack.c.b16 %v876, %v875
    %v1058 = vpack.c.b16 %v878, %v877
    %v1059 = vpack.c.b16 %v880, %v879
    %v1060 = vpack.c.b16 %v882, %v881
    %v1061 = vpack.c.b16 %v884, %v883
    %v1062 = vpack.c.b16 %v886, %v885
    %v1063 = vpack.c.b16 %v888, %v887
    %v1064 = vpack.c.b16 %v890, %v889
    %v1065 = vpack.c.b16 %v892, %v891
    %v1066 = vpack.c.b16 %v894, %v893
    %v1067 = vpack.c.b16 %v896, %v895
    %v1068 = vpack.c.b16 %v898, %v897
    %v1069 = vpack.c.b16 %v900, %v899
    %v1070 = vpack.c.b16 %v902, %v901
    %v1071 = vpack.c.b16 %v904, %v903
    %v1072 = vpack.c.b16 %v906, %v905
    %v1073 = vpack.c.b16 %v908, %v907
    %v1074 = vpack.c.b16 %v910, %v909
    %v1075 = vpack.c.b16 %v912, %v911
    %v1076 = vpack.c.b16 %v914, %v913
    %v1077 = vpack.c.b16 %v916, %v915
    %v1078 = vpack.c.b16 %v918, %v917
    %v1079 = vpack.c.b16 %v920, %v919
    %v1080 = vpack.c.b16 %v922, %v921
    %v1081 = vpack.c.b16 %v924, %v923
    %v1082 = vpack.c.b16 %v926, %v925
    %v1083 = vpack.c.b16 %v928, %v927
    %v1084 = vpack.c.b16 %v930, %v929
    %v1085 = vpack.c.b16 %v932, %v931
    %v1086 = vpack.c.b16 %v934, %v933
    %v1087 = vpack.c.b16 %v936, %v935
    %v1088 = vpack.c.b16 %v938, %v937
    %v1089 = vpack.c.b16 %v940, %v939
    %v1090 = vpack.c.b16 %v942, %v941
    %v1091 = vpack.c.b16 %v944, %v943
    %v1092 = vpack.c.b16 %v946, %v945
    %v1093 = vpack.c.b16 %v948, %v947
    %v1094 = vpack.c.b16 %v950, %v949
    %v1095 = vpack.c.b16 %v952, %v951
    %v1096 = vpack.c.b16 %v954, %v953
    %v1097 = vpack.c.b16 %v956, %v955
    %v1098 = vpack.c.b16 %v958, %v957
    %v1099 = vpack.c.b16 %v960, %v959
    %v1100 = vpack.c.b16 %v962, %v961
    %v1101 = vpack.c.b16 %v964, %v963
    %v1102 = vpack.c.b16 %v966, %v965
    %v1103 = vpack.c.b16 %v968, %v967
    %v1104 = vpack.c.b16 %v970, %v969
    %v1105 = vpack.c.b16 %v972, %v971
    %v1106 = vpack.c.b16 %v974, %v973
    %v1107 = vpack.c.b16 %v976, %v975
    %v1108 = vpack.c.b16 %v978, %v977
    %v1109 = vpack.c.b16 %v980, %v979
    %v1110 = vpack.c.b16 %v982, %v981
    %1239 = vmatprep.subr.bf16.mxu0 0
    %1240 = vmatpush1.bf16.msra.mxu0 %v990
    %1241 = vmatprep.subr.bf16.mxu0 0
    %1242 = vmatpush1.bf16.msra.mxu0 %v989
    %1243 = vmatprep.subr.bf16.mxu0 0
    %1244 = vmatpush1.bf16.msra.mxu0 %v988
    %1245 = vmatprep.subr.bf16.mxu0 0
    %1246 = vmatpush1.bf16.msra.mxu0 %v987
    %1247 = vmatprep.subr.bf16.mxu0 0
    %1248 = vmatpush1.bf16.msra.mxu0 %v986
    %1249 = vmatprep.subr.bf16.mxu0 0
    %1250 = vmatpush1.bf16.msra.mxu0 %v985
    %1251 = vmatprep.subr.bf16.mxu0 0
    %1252 = vmatpush1.bf16.msra.mxu0 %v984
    %1253 = vmatprep.subr.bf16.mxu0 0
    %1254 = vmatpush1.bf16.msra.mxu0 %v983
    %1255 = vmatprep.subr.bf16.mxu0 0
    %1256 = vmatpush2.bf16.msra.mxu0 %v998
    %1257 = vmatprep.subr.bf16.mxu0 0
    %1258 = vmatpush2.bf16.msra.mxu0 %v997
    %1259 = vmatprep.subr.bf16.mxu0 0
    %1260 = vmatpush2.bf16.msra.mxu0 %v996
    %1261 = vmatprep.subr.bf16.mxu0 0
    %1262 = vmatpush2.bf16.msra.mxu0 %v995
    %1263 = vmatprep.subr.bf16.mxu0 0
    %1264 = vmatpush2.bf16.msra.mxu0 %v994
    %1265 = vmatprep.subr.bf16.mxu0 0
    %1266 = vmatpush2.bf16.msra.mxu0 %v993
    %1267 = vmatprep.subr.bf16.mxu0 0
    %1268 = vmatpush2.bf16.msra.mxu0 %v992
    %1269 = vmatprep.subr.bf16.mxu0 0
    %1270 = vmatpush2.bf16.msra.mxu0 %v991
    %1271 = vmatprep.mubr.bf16.mxu0 %v408
    %1272 = vmatmul.mubr.bf16.gmra.mxu0 %v407
    %v1273 = vpop.f32.mrf.mxu0
    %v1274 = vadd.f32 %v309, %v1273
    %v1275 = vpop.f32.mrf.mxu0
    %v1276 = vpop.f32.mrf.mxu0
    %v1277 = vadd.f32 %v309, %v1276
    %v1278 = vpop.f32.mrf.mxu0
    %1279 = vmatprep.mubr.bf16.mxu0 %v424
    %1280 = vmatmul.mubr.bf16.gmra.mxu0 %v423
    %v1281 = vpop.f32.mrf.mxu0
    %v1282 = vadd.f32 %v309, %v1281
    %v1283 = vpop.f32.mrf.mxu0
    %v1284 = vpop.f32.mrf.mxu0
    %v1285 = vadd.f32 %v309, %v1284
    %v1286 = vpop.f32.mrf.mxu0
    %1287 = vdwg.mxu0
    %1288 = vmatprep.subr.bf16.mxu0 0
    %1289 = vmatpush1.bf16.msra.mxu0 %v1006
    %1290 = vmatprep.subr.bf16.mxu0 0
    %1291 = vmatpush1.bf16.msra.mxu0 %v1005
    %1292 = vmatprep.subr.bf16.mxu0 0
    %1293 = vmatpush1.bf16.msra.mxu0 %v1004
    %1294 = vmatprep.subr.bf16.mxu0 0
    %1295 = vmatpush1.bf16.msra.mxu0 %v1003
    %1296 = vmatprep.subr.bf16.mxu0 0
    %1297 = vmatpush1.bf16.msra.mxu0 %v1002
    %1298 = vmatprep.subr.bf16.mxu0 0
    %1299 = vmatpush1.bf16.msra.mxu0 %v1001
    %1300 = vmatprep.subr.bf16.mxu0 0
    %1301 = vmatpush1.bf16.msra.mxu0 %v1000
    %1302 = vmatprep.subr.bf16.mxu0 0
    %1303 = vmatpush1.bf16.msra.mxu0 %v999
    %1304 = vmatprep.subr.bf16.mxu0 0
    %1305 = vmatpush2.bf16.msra.mxu0 %v1014
    %1306 = vmatprep.subr.bf16.mxu0 0
    %1307 = vmatpush2.bf16.msra.mxu0 %v1013
    %1308 = vmatprep.subr.bf16.mxu0 0
    %1309 = vmatpush2.bf16.msra.mxu0 %v1012
    %1310 = vmatprep.subr.bf16.mxu0 0
    %1311 = vmatpush2.bf16.msra.mxu0 %v1011
    %1312 = vmatprep.subr.bf16.mxu0 0
    %1313 = vmatpush2.bf16.msra.mxu0 %v1010
    %1314 = vmatprep.subr.bf16.mxu0 0
    %1315 = vmatpush2.bf16.msra.mxu0 %v1009
    %1316 = vmatprep.subr.bf16.mxu0 0
    %1317 = vmatpush2.bf16.msra.mxu0 %v1008
    %1318 = vmatprep.subr.bf16.mxu0 0
    %1319 = vmatpush2.bf16.msra.mxu0 %v1007
    %1320 = vmatprep.mubr.bf16.mxu0 %v410
    %1321 = vmatmul.mubr.bf16.gmra.mxu0 %v409
    %v1322 = vpop.f32.mrf.mxu0
    %v1323 = vadd.f32 %v1274, %v1322
    %v1324 = vpop.f32.mrf.mxu0
    %v1325 = vpop.f32.mrf.mxu0
    %v1326 = vadd.f32 %v1277, %v1325
    %v1327 = vpop.f32.mrf.mxu0
    %1328 = vmatprep.mubr.bf16.mxu0 %v426
    %1329 = vmatmul.mubr.bf16.gmra.mxu0 %v425
    %v1330 = vpop.f32.mrf.mxu0
    %v1331 = vadd.f32 %v1282, %v1330
    %v1332 = vpop.f32.mrf.mxu0
    %v1333 = vpop.f32.mrf.mxu0
    %v1334 = vadd.f32 %v1285, %v1333
    %v1335 = vpop.f32.mrf.mxu0
    %1336 = vdwg.mxu0
    %1337 = vmatprep.subr.bf16.mxu0 0
    %1338 = vmatpush1.bf16.msra.mxu0 %v1022
    %1339 = vmatprep.subr.bf16.mxu0 0
    %1340 = vmatpush1.bf16.msra.mxu0 %v1021
    %1341 = vmatprep.subr.bf16.mxu0 0
    %1342 = vmatpush1.bf16.msra.mxu0 %v1020
    %1343 = vmatprep.subr.bf16.mxu0 0
    %1344 = vmatpush1.bf16.msra.mxu0 %v1019
    %1345 = vmatprep.subr.bf16.mxu0 0
    %1346 = vmatpush1.bf16.msra.mxu0 %v1018
    %1347 = vmatprep.subr.bf16.mxu0 0
    %1348 = vmatpush1.bf16.msra.mxu0 %v1017
    %1349 = vmatprep.subr.bf16.mxu0 0
    %1350 = vmatpush1.bf16.msra.mxu0 %v1016
    %1351 = vmatprep.subr.bf16.mxu0 0
    %1352 = vmatpush1.bf16.msra.mxu0 %v1015
    %1353 = vmatprep.subr.bf16.mxu0 0
    %1354 = vmatpush2.bf16.msra.mxu0 %v1030
    %1355 = vmatprep.subr.bf16.mxu0 0
    %1356 = vmatpush2.bf16.msra.mxu0 %v1029
    %1357 = vmatprep.subr.bf16.mxu0 0
    %1358 = vmatpush2.bf16.msra.mxu0 %v1028
    %1359 = vmatprep.subr.bf16.mxu0 0
    %1360 = vmatpush2.bf16.msra.mxu0 %v1027
    %1361 = vmatprep.subr.bf16.mxu0 0
    %1362 = vmatpush2.bf16.msra.mxu0 %v1026
    %1363 = vmatprep.subr.bf16.mxu0 0
    %1364 = vmatpush2.bf16.msra.mxu0 %v1025
    %1365 = vmatprep.subr.bf16.mxu0 0
    %1366 = vmatpush2.bf16.msra.mxu0 %v1024
    %1367 = vmatprep.subr.bf16.mxu0 0
    %1368 = vmatpush2.bf16.msra.mxu0 %v1023
    %1369 = vmatprep.mubr.bf16.mxu0 %v412
    %1370 = vmatmul.mubr.bf16.gmra.mxu0 %v411
    %v1371 = vpop.f32.mrf.mxu0
    %v1372 = vadd.f32 %v1323, %v1371
    %v1373 = vpop.f32.mrf.mxu0
    %v1374 = vpop.f32.mrf.mxu0
    %v1375 = vadd.f32 %v1326, %v1374
    %v1376 = vpop.f32.mrf.mxu0
    %1377 = vmatprep.mubr.bf16.mxu0 %v428
    %1378 = vmatmul.mubr.bf16.gmra.mxu0 %v427
    %v1379 = vpop.f32.mrf.mxu0
    %v1380 = vadd.f32 %v1331, %v1379
    %v1381 = vpop.f32.mrf.mxu0
    %v1382 = vpop.f32.mrf.mxu0
    %v1383 = vadd.f32 %v1334, %v1382
    %v1384 = vpop.f32.mrf.mxu0
    %1385 = vdwg.mxu0
    %1386 = vmatprep.subr.bf16.mxu0 0
    %1387 = vmatpush1.bf16.msra.mxu0 %v1038
    %1388 = vmatprep.subr.bf16.mxu0 0
    %1389 = vmatpush1.bf16.msra.mxu0 %v1037
    %1390 = vmatprep.subr.bf16.mxu0 0
    %1391 = vmatpush1.bf16.msra.mxu0 %v1036
    %1392 = vmatprep.subr.bf16.mxu0 0
    %1393 = vmatpush1.bf16.msra.mxu0 %v1035
    %1394 = vmatprep.subr.bf16.mxu0 0
    %1395 = vmatpush1.bf16.msra.mxu0 %v1034
    %1396 = vmatprep.subr.bf16.mxu0 0
    %1397 = vmatpush1.bf16.msra.mxu0 %v1033
    %1398 = vmatprep.subr.bf16.mxu0 0
    %1399 = vmatpush1.bf16.msra.mxu0 %v1032
    %1400 = vmatprep.subr.bf16.mxu0 0
    %1401 = vmatpush1.bf16.msra.mxu0 %v1031
    %1402 = vmatprep.subr.bf16.mxu0 0
    %1403 = vmatpush2.bf16.msra.mxu0 %v1046
    %1404 = vmatprep.subr.bf16.mxu0 0
    %1405 = vmatpush2.bf16.msra.mxu0 %v1045
    %1406 = vmatprep.subr.bf16.mxu0 0
    %1407 = vmatpush2.bf16.msra.mxu0 %v1044
    %1408 = vmatprep.subr.bf16.mxu0 0
    %1409 = vmatpush2.bf16.msra.mxu0 %v1043
    %1410 = vmatprep.subr.bf16.mxu0 0
    %1411 = vmatpush2.bf16.msra.mxu0 %v1042
    %1412 = vmatprep.subr.bf16.mxu0 0
    %1413 = vmatpush2.bf16.msra.mxu0 %v1041
    %1414 = vmatprep.subr.bf16.mxu0 0
    %1415 = vmatpush2.bf16.msra.mxu0 %v1040
    %1416 = vmatprep.subr.bf16.mxu0 0
    %1417 = vmatpush2.bf16.msra.mxu0 %v1039
    %1418 = vmatprep.mubr.bf16.mxu0 %v414
    %1419 = vmatmul.mubr.bf16.gmra.mxu0 %v413
    %v1420 = vpop.f32.mrf.mxu0
    %v1421 = vadd.f32 %v1372, %v1420
    %v1422 = vpop.f32.mrf.mxu0
    %v1423 = vpop.f32.mrf.mxu0
    %v1424 = vadd.f32 %v1375, %v1423
    %v1425 = vpop.f32.mrf.mxu0
    %1426 = vmatprep.mubr.bf16.mxu0 %v430
    %1427 = vmatmul.mubr.bf16.gmra.mxu0 %v429
    %v1428 = vpop.f32.mrf.mxu0
    %v1429 = vadd.f32 %v1380, %v1428
    %v1430 = vpop.f32.mrf.mxu0
    %v1431 = vpop.f32.mrf.mxu0
    %v1432 = vadd.f32 %v1383, %v1431
    %v1433 = vpop.f32.mrf.mxu0
    %1434 = vdwg.mxu0
    %1435 = vmatprep.subr.bf16.mxu0 0
    %1436 = vmatpush1.bf16.msra.mxu0 %v1054
    %1437 = vmatprep.subr.bf16.mxu0 0
    %1438 = vmatpush1.bf16.msra.mxu0 %v1053
    %1439 = vmatprep.subr.bf16.mxu0 0
    %1440 = vmatpush1.bf16.msra.mxu0 %v1052
    %1441 = vmatprep.subr.bf16.mxu0 0
    %1442 = vmatpush1.bf16.msra.mxu0 %v1051
    %1443 = vmatprep.subr.bf16.mxu0 0
    %1444 = vmatpush1.bf16.msra.mxu0 %v1050
    %1445 = vmatprep.subr.bf16.mxu0 0
    %1446 = vmatpush1.bf16.msra.mxu0 %v1049
    %1447 = vmatprep.subr.bf16.mxu0 0
    %1448 = vmatpush1.bf16.msra.mxu0 %v1048
    %1449 = vmatprep.subr.bf16.mxu0 0
    %1450 = vmatpush1.bf16.msra.mxu0 %v1047
    %1451 = vmatprep.subr.bf16.mxu0 0
    %1452 = vmatpush2.bf16.msra.mxu0 %v1062
    %1453 = vmatprep.subr.bf16.mxu0 0
    %1454 = vmatpush2.bf16.msra.mxu0 %v1061
    %1455 = vmatprep.subr.bf16.mxu0 0
    %1456 = vmatpush2.bf16.msra.mxu0 %v1060
    %1457 = vmatprep.subr.bf16.mxu0 0
    %1458 = vmatpush2.bf16.msra.mxu0 %v1059
    %1459 = vmatprep.subr.bf16.mxu0 0
    %1460 = vmatpush2.bf16.msra.mxu0 %v1058
    %1461 = vmatprep.subr.bf16.mxu0 0
    %1462 = vmatpush2.bf16.msra.mxu0 %v1057
    %1463 = vmatprep.subr.bf16.mxu0 0
    %1464 = vmatpush2.bf16.msra.mxu0 %v1056
    %1465 = vmatprep.subr.bf16.mxu0 0
    %1466 = vmatpush2.bf16.msra.mxu0 %v1055
    %1467 = vmatprep.mubr.bf16.mxu0 %v416
    %1468 = vmatmul.mubr.bf16.gmra.mxu0 %v415
    %v1469 = vpop.f32.mrf.mxu0
    %v1470 = vadd.f32 %v1421, %v1469
    %v1471 = vpop.f32.mrf.mxu0
    %v1472 = vpop.f32.mrf.mxu0
    %v1473 = vadd.f32 %v1424, %v1472
    %v1474 = vpop.f32.mrf.mxu0
    %1475 = vmatprep.mubr.bf16.mxu0 %v432
    %1476 = vmatmul.mubr.bf16.gmra.mxu0 %v431
    %v1477 = vpop.f32.mrf.mxu0
    %v1478 = vadd.f32 %v1429, %v1477
    %v1479 = vpop.f32.mrf.mxu0
    %v1480 = vpop.f32.mrf.mxu0
    %v1481 = vadd.f32 %v1432, %v1480
    %v1482 = vpop.f32.mrf.mxu0
    %1483 = vdwg.mxu0
    %1484 = vmatprep.subr.bf16.mxu0 0
    %1485 = vmatpush1.bf16.msra.mxu0 %v1070
    %1486 = vmatprep.subr.bf16.mxu0 0
    %1487 = vmatpush1.bf16.msra.mxu0 %v1069
    %1488 = vmatprep.subr.bf16.mxu0 0
    %1489 = vmatpush1.bf16.msra.mxu0 %v1068
    %1490 = vmatprep.subr.bf16.mxu0 0
    %1491 = vmatpush1.bf16.msra.mxu0 %v1067
    %1492 = vmatprep.subr.bf16.mxu0 0
    %1493 = vmatpush1.bf16.msra.mxu0 %v1066
    %1494 = vmatprep.subr.bf16.mxu0 0
    %1495 = vmatpush1.bf16.msra.mxu0 %v1065
    %1496 = vmatprep.subr.bf16.mxu0 0
    %1497 = vmatpush1.bf16.msra.mxu0 %v1064
    %1498 = vmatprep.subr.bf16.mxu0 0
    %1499 = vmatpush1.bf16.msra.mxu0 %v1063
    %1500 = vmatprep.subr.bf16.mxu0 0
    %1501 = vmatpush2.bf16.msra.mxu0 %v1078
    %1502 = vmatprep.subr.bf16.mxu0 0
    %1503 = vmatpush2.bf16.msra.mxu0 %v1077
    %1504 = vmatprep.subr.bf16.mxu0 0
    %1505 = vmatpush2.bf16.msra.mxu0 %v1076
    %1506 = vmatprep.subr.bf16.mxu0 0
    %1507 = vmatpush2.bf16.msra.mxu0 %v1075
    %1508 = vmatprep.subr.bf16.mxu0 0
    %1509 = vmatpush2.bf16.msra.mxu0 %v1074
    %1510 = vmatprep.subr.bf16.mxu0 0
    %1511 = vmatpush2.bf16.msra.mxu0 %v1073
    %1512 = vmatprep.subr.bf16.mxu0 0
    %1513 = vmatpush2.bf16.msra.mxu0 %v1072
    %1514 = vmatprep.subr.bf16.mxu0 0
    %1515 = vmatpush2.bf16.msra.mxu0 %v1071
    %1516 = vmatprep.mubr.bf16.mxu0 %v418
    %1517 = vmatmul.mubr.bf16.gmra.mxu0 %v417
    %v1518 = vpop.f32.mrf.mxu0
    %v1519 = vadd.f32 %v1470, %v1518
    %v1520 = vpop.f32.mrf.mxu0
    %v1521 = vpop.f32.mrf.mxu0
    %v1522 = vadd.f32 %v1473, %v1521
    %v1523 = vpop.f32.mrf.mxu0
    %1524 = vmatprep.mubr.bf16.mxu0 %v434
    %1525 = vmatmul.mubr.bf16.gmra.mxu0 %v433
    %v1526 = vpop.f32.mrf.mxu0
    %v1527 = vadd.f32 %v1478, %v1526
    %v1528 = vpop.f32.mrf.mxu0
    %v1529 = vpop.f32.mrf.mxu0
    %v1530 = vadd.f32 %v1481, %v1529
    %v1531 = vpop.f32.mrf.mxu0
    %1532 = vdwg.mxu0
    %1533 = vmatprep.subr.bf16.mxu0 0
    %1534 = vmatpush1.bf16.msra.mxu0 %v1086
    %1535 = vmatprep.subr.bf16.mxu0 0
    %1536 = vmatpush1.bf16.msra.mxu0 %v1085
    %1537 = vmatprep.subr.bf16.mxu0 0
    %1538 = vmatpush1.bf16.msra.mxu0 %v1084
    %1539 = vmatprep.subr.bf16.mxu0 0
    %1540 = vmatpush1.bf16.msra.mxu0 %v1083
    %1541 = vmatprep.subr.bf16.mxu0 0
    %1542 = vmatpush1.bf16.msra.mxu0 %v1082
    %1543 = vmatprep.subr.bf16.mxu0 0
    %1544 = vmatpush1.bf16.msra.mxu0 %v1081
    %1545 = vmatprep.subr.bf16.mxu0 0
    %1546 = vmatpush1.bf16.msra.mxu0 %v1080
    %1547 = vmatprep.subr.bf16.mxu0 0
    %1548 = vmatpush1.bf16.msra.mxu0 %v1079
    %1549 = vmatprep.subr.bf16.mxu0 0
    %1550 = vmatpush2.bf16.msra.mxu0 %v1094
    %1551 = vmatprep.subr.bf16.mxu0 0
    %1552 = vmatpush2.bf16.msra.mxu0 %v1093
    %1553 = vmatprep.subr.bf16.mxu0 0
    %1554 = vmatpush2.bf16.msra.mxu0 %v1092
    %1555 = vmatprep.subr.bf16.mxu0 0
    %1556 = vmatpush2.bf16.msra.mxu0 %v1091
    %1557 = vmatprep.subr.bf16.mxu0 0
    %1558 = vmatpush2.bf16.msra.mxu0 %v1090
    %1559 = vmatprep.subr.bf16.mxu0 0
    %1560 = vmatpush2.bf16.msra.mxu0 %v1089
    %1561 = vmatprep.subr.bf16.mxu0 0
    %1562 = vmatpush2.bf16.msra.mxu0 %v1088
    %1563 = vmatprep.subr.bf16.mxu0 0
    %1564 = vmatpush2.bf16.msra.mxu0 %v1087
    %1565 = vmatprep.mubr.bf16.mxu0 %v420
    %1566 = vmatmul.mubr.bf16.gmra.mxu0 %v419
    %v1567 = vpop.f32.mrf.mxu0
    %v1568 = vadd.f32 %v1519, %v1567
    %v1569 = vpop.f32.mrf.mxu0
    %v1570 = vpop.f32.mrf.mxu0
    %v1571 = vadd.f32 %v1522, %v1570
    %v1572 = vpop.f32.mrf.mxu0
    %1573 = vmatprep.mubr.bf16.mxu0 %v436
    %1574 = vmatmul.mubr.bf16.gmra.mxu0 %v435
    %v1575 = vpop.f32.mrf.mxu0
    %v1576 = vadd.f32 %v1527, %v1575
    %v1577 = vpop.f32.mrf.mxu0
    %v1578 = vpop.f32.mrf.mxu0
    %v1579 = vadd.f32 %v1530, %v1578
    %v1580 = vpop.f32.mrf.mxu0
    %1581 = vdwg.mxu0
    %1582 = vmatprep.subr.bf16.mxu0 0
    %1583 = vmatpush1.bf16.msra.mxu0 %v1102
    %1584 = vmatprep.subr.bf16.mxu0 0
    %1585 = vmatpush1.bf16.msra.mxu0 %v1101
    %1586 = vmatprep.subr.bf16.mxu0 0
    %1587 = vmatpush1.bf16.msra.mxu0 %v1100
    %1588 = vmatprep.subr.bf16.mxu0 0
    %1589 = vmatpush1.bf16.msra.mxu0 %v1099
    %1590 = vmatprep.subr.bf16.mxu0 0
    %1591 = vmatpush1.bf16.msra.mxu0 %v1098
    %1592 = vmatprep.subr.bf16.mxu0 0
    %1593 = vmatpush1.bf16.msra.mxu0 %v1097
    %1594 = vmatprep.subr.bf16.mxu0 0
    %1595 = vmatpush1.bf16.msra.mxu0 %v1096
    %1596 = vmatprep.subr.bf16.mxu0 0
    %1597 = vmatpush1.bf16.msra.mxu0 %v1095
    %1598 = vmatprep.subr.bf16.mxu0 0
    %1599 = vmatpush2.bf16.msra.mxu0 %v1110
    %1600 = vmatprep.subr.bf16.mxu0 0
    %1601 = vmatpush2.bf16.msra.mxu0 %v1109
    %1602 = vmatprep.subr.bf16.mxu0 0
    %1603 = vmatpush2.bf16.msra.mxu0 %v1108
    %1604 = vmatprep.subr.bf16.mxu0 0
    %1605 = vmatpush2.bf16.msra.mxu0 %v1107
    %1606 = vmatprep.subr.bf16.mxu0 0
    %1607 = vmatpush2.bf16.msra.mxu0 %v1106
    %1608 = vmatprep.subr.bf16.mxu0 0
    %1609 = vmatpush2.bf16.msra.mxu0 %v1105
    %1610 = vmatprep.subr.bf16.mxu0 0
    %1611 = vmatpush2.bf16.msra.mxu0 %v1104
    %1612 = vmatprep.subr.bf16.mxu0 0
    %1613 = vmatpush2.bf16.msra.mxu0 %v1103
    %1614 = vmatprep.mubr.bf16.mxu0 %v422
    %1615 = vmatmul.mubr.bf16.gmra.mxu0 %v421
    %v1616 = vpop.f32.mrf.mxu0
    %v1617 = vadd.f32 %v1568, %v1616
    %v1618 = vpop.f32.mrf.mxu0
    %v1619 = vpop.f32.mrf.mxu0
    %v1620 = vadd.f32 %v1571, %v1619
    %v1621 = vpop.f32.mrf.mxu0
    %1622 = vmatprep.mubr.bf16.mxu0 %v438
    %1623 = vmatmul.mubr.bf16.gmra.mxu0 %v437
    %v1624 = vpop.f32.mrf.mxu0
    %v1625 = vadd.f32 %v1576, %v1624
    %v1626 = vpop.f32.mrf.mxu0
    %v1627 = vpop.f32.mrf.mxu0
    %v1628 = vadd.f32 %v1579, %v1627
    %v1629 = vpop.f32.mrf.mxu0
    %1630 = vdwg.mxu0
    %v1631 = vmax.f32 %v1617, 0.0
    %v1632 = vmax.f32 %v1620, 0.0
    %v1633 = vmax.f32 %v1625, 0.0
    %v1634 = vmax.f32 %v1628, 0.0
    %vm1635 = vcmask 261120
    %1636 = vst.msk [vmem:[#allocation2] sm:$0xff] %vm1635, %v1631
    %1637 = vst.msk [vmem:[#allocation2 + $0x8] sm:$0xff] %vm1635, %v1632
    %1638 = vst.msk [vmem:[#allocation2 + $0x10] sm:$0xff] %vm1635, %v1633
    %1639 = vst.msk [vmem:[#allocation2 + $0x18] sm:$0xff] %vm1635, %v1634
    // Predicated region
    $region14: #{tpu_custom_call.1} parent=1 // pred_check
      _
    $region15: #{tpu_custom_call.1} parent=1 // pred_check_branch
      %1641 = sbr.rel (0) target = $region17
    $region16: #{tpu_custom_call.1} parent=1 // pred_region
      %s1643 = ssub.s32 512, 512
      %1644 = vsyncadd [#allocation3], %s1643
      %s1645 = sshll.u32 [#allocation2], 4
      %s1646 = int_to_ptr.vmem [resolvable:$true] %s1645
      %1651 = dma.vmem_to_hbm [thread:$0]  %s1646, 512, %s3, [#allocation3], 128, 128, 8
    $region17: #{tpu_custom_call.1} parent=1 // pred_fallthru
      _
    // Predicated region
    $region18: #{tpu_custom_call.1} parent=1 // pred_check
      _
    $region19: #{tpu_custom_call.1} parent=1 // pred_check_branch
      %1653 = sbr.rel (0) target = $region21
    $region20: #{tpu_custom_call.1} parent=1 // pred_region
      %1654 = dma.done [#allocation3], 512
    $region21: #{tpu_custom_call.1} parent=1 // pred_fallthru
      _
    %1655 = vsyncpa [#allocation3], 1

</llo_original>
